<compile_context>
chip_gen: v7x
topology: tpu7x:2x2x1
jax: 0.10.0
libtpu: 0.0.40
codegen_flags: <defaults>
</compile_context>

<pallas_src>
import functools

import jax
import jax.numpy as jnp
import numpy as np
from jax.experimental import pallas as pl
from jax.experimental.pallas import tpu as pltpu


def _round_up(a, b):
    return (a + b - 1) // b * b


def _label_smoothing_kernel(x_ref, tgt_ref, loss_ref, *dist_refs,
                            n_rows, size, padding_idx, smoothing, out_dtype):
    tile_n = x_ref.shape[0]
    x = x_ref[...].astype(jnp.float32)            # (tile_n, V)
    tgt = tgt_ref[...]                            # (tile_n, 1) int32

    confidence = 1.0 - smoothing
    smooth_val = smoothing / (size - 2)
    # true_dist only takes two nonzero values -> log() folds to two constants
    # (no per-element transcendental).
    log_conf = float(np.log(confidence)) if confidence > 0.0 else 0.0
    log_smooth = float(np.log(smooth_val)) if smooth_val > 0.0 else 0.0

    # Lane-constant smoothing vector with the padding column already zeroed
    # (cost ~V elements, not tile_n * V).
    col = jax.lax.broadcasted_iota(jnp.int32, (1, size), 1)              # (1, V)
    lane_smooth = jnp.where(col == padding_idx, 0.0,
                            smooth_val).astype(jnp.float32)              # (1, V)

    # Row validity: inside the real N rows of this (possibly partial) block
    # and not a padded target.
    row = (jax.lax.broadcasted_iota(jnp.int32, (tile_n, 1), 0)
           + pl.program_id(0) * tile_n)                                  # (tile_n, 1)
    row_ok = (row < n_rows) & (tgt != padding_idx)                       # (tile_n, 1)

    # Full-tile work: 1 compare, 2 selects, 1 sub, 1 mul.
    is_tgt = col == tgt                                                  # (tile_n, V)
    td = jnp.where(is_tgt, jnp.float32(confidence), lane_smooth)
    log_td = jnp.where(is_tgt, jnp.float32(log_conf), jnp.float32(log_smooth))
    contrib = td * (log_td - x)

    # Lane-reduce first, then mask invalid rows with a select.  The select
    # also discards NaN/Inf garbage read from the out-of-bounds rows of a
    # partial trailing block.
    row_loss = jnp.where(row_ok,
                         jnp.sum(contrib, axis=1, keepdims=True),
                         jnp.float32(0.0))                               # (tile_n, 1)
    loss_ref[0, 0] = jnp.sum(row_loss)

    if dist_refs:
        dist_refs[0][...] = jnp.where(row_ok, td,
                                      jnp.float32(0.0)).astype(out_dtype)


def _pick_tile_rows(n_rows, vocab, x_bytes, want_dist):
    # Size by bytes: ~8 MiB total for the two pipeline buffers of IO tiles,
    # i.e. a ~4 MiB x block (plus true_dist block if requested).
    io_per_row = vocab * x_bytes + 4               # x row + int32 target
    if want_dist:
        io_per_row += vocab * x_bytes              # true_dist writeback row
    io_budget = 8 * 1024 * 1024
    tile = io_budget // (2 * io_per_row)
    tile = max(8, min(4096, (tile // 8) * 8))
    return min(tile, _round_up(n_rows, 8))


def _vmem_limit(tile_n, vocab, x_bytes, want_dist):
    io = tile_n * (vocab * x_bytes + 4)
    if want_dist:
        io += tile_n * vocab * x_bytes
    temps = 4 * tile_n * vocab * 4                 # f32 intermediates (worst case)
    need = 2 * io + temps + (1 << 20)
    # Keep <= 48 MiB so it also fits v7x (64 MiB VMEM per TensorCore).
    return int(min(48 * 1024 * 1024, max(need, 32 * 1024 * 1024)))


def _row_axis_semantics(num_tiles):
    # On v7x (2 TensorCores/chip) shard the row-tile axis across cores; on
    # v5e/v6e keep plain "parallel".
    try:
        kind = jax.devices()[0].device_kind.lower()
    except Exception:
        kind = ""
    core_parallel = getattr(pltpu, "CORE_PARALLEL", None)
    if core_parallel is not None and num_tiles >= 2 and ("v7" in kind or "7x" in kind):
        return (core_parallel,)
    return ("parallel",)


def label_smoothing_loss(x, target, *, size, padding_idx, smoothing,
                         return_true_dist=False, tile_rows=None):
    """x: [N, V] float (f32 or bf16) log-probabilities; target: [N] int indices.

    Returns loss (f32 scalar), or (loss, true_dist [N, V] in x.dtype) when
    return_true_dist=True.
    """
    N, V = x.shape
    assert V == size
    x_bytes = jnp.dtype(x.dtype).itemsize

    tile_n = tile_rows if tile_rows is not None else _pick_tile_rows(
        N, V, x_bytes, return_true_dist)
    tile_n = max(8, (tile_n // 8) * 8)
    num_tiles = -(-N // tile_n)                    # cdiv; last block may be partial

    tgt2d = target.astype(jnp.int32).reshape(N, 1)

    kernel = functools.partial(
        _label_smoothing_kernel,
        n_rows=N, size=size, padding_idx=padding_idx, smoothing=smoothing,
        out_dtype=x.dtype)

    in_specs = [
        pl.BlockSpec((tile_n, V), lambda i: (i, 0)),   # last dim == full V
        pl.BlockSpec((tile_n, 1), lambda i: (i, 0)),
    ]
    out_shapes = [jax.ShapeDtypeStruct((num_tiles, 1), jnp.float32)]
    out_specs = [pl.BlockSpec((1, 1), lambda i: (i, 0),
                              memory_space=pltpu.MemorySpace.SMEM)]
    if return_true_dist:
        out_shapes.append(jax.ShapeDtypeStruct((N, V), x.dtype))
        out_specs.append(pl.BlockSpec((tile_n, V), lambda i: (i, 0)))

    outs = pl.pallas_call(
        kernel,
        grid=(num_tiles,),
        in_specs=in_specs,
        out_specs=tuple(out_specs),
        out_shape=tuple(out_shapes),
        compiler_params=pltpu.CompilerParams(
            dimension_semantics=_row_axis_semantics(num_tiles),
            vmem_limit_bytes=_vmem_limit(tile_n, V, x_bytes, return_true_dist)),
    )(x, tgt2d)

    loss = jnp.sum(outs[0])
    if return_true_dist:
        return loss, outs[1]
    return loss


def _reference(x, target, *, size, padding_idx, smoothing):
    # Pure-JAX reference mirroring the PyTorch module.
    N, V = x.shape
    confidence = 1.0 - smoothing
    col = jnp.arange(V)[None, :]
    tgt = target[:, None]
    td = jnp.full((N, V), smoothing / (size - 2), dtype=jnp.float32)
    td = jnp.where(col == tgt, confidence, td)
    td = td.at[:, padding_idx].set(0.0)
    td = jnp.where(tgt == padding_idx, 0.0, td)
    x32 = x.astype(jnp.float32)
    contrib = jnp.where(td > 0, td * (jnp.log(jnp.maximum(td, 1e-30)) - x32), 0.0)
    return jnp.sum(contrib), td


def _run_case(key, N, V, padding_idx, smoothing, dtype=jnp.float32, tile_rows=None):
    k_logits, k_tgt = jax.random.split(key)
    logits = jax.random.normal(k_logits, (N, V), dtype=jnp.float32)
    x = jax.nn.log_softmax(logits, axis=-1).astype(dtype)
    target = jax.random.randint(k_tgt, (N,), 1, V, dtype=jnp.int32)
    target = target.at[N // 2].set(padding_idx)        # one padded position

    loss_only = label_smoothing_loss(
        x, target, size=V, padding_idx=padding_idx, smoothing=smoothing,
        tile_rows=tile_rows)
    loss, true_dist = label_smoothing_loss(
        x, target, size=V, padding_idx=padding_idx, smoothing=smoothing,
        return_true_dist=True, tile_rows=tile_rows)
    jax.block_until_ready((loss_only, loss, true_dist))

    ref_loss, ref_td = _reference(
        x, target, size=V, padding_idx=padding_idx, smoothing=smoothing)

    tol = 1e-5 if dtype == jnp.float32 else 1e-4
    assert np.allclose(np.asarray(loss), np.asarray(ref_loss),
                       rtol=tol, atol=tol), (float(loss), float(ref_loss))
    assert np.allclose(np.asarray(loss_only), np.asarray(ref_loss),
                       rtol=tol, atol=tol), (float(loss_only), float(ref_loss))
    td_kernel = np.asarray(true_dist.astype(jnp.float32))
    td_ref = np.asarray(ref_td.astype(dtype).astype(jnp.float32))
    assert np.allclose(td_kernel, td_ref, rtol=1e-6, atol=1e-6)


if __name__ == "__main__":
    key = jax.random.PRNGKey(0)
    k1, k2, k3, k4 = jax.random.split(key, 4)

    # Aligned small case: N=8 positions, vocab V=128.
    _run_case(k1, N=8, V=128, padding_idx=0, smoothing=0.1)
    # Ragged N and V (partial row block, last dim not a multiple of 128).
    _run_case(k2, N=10, V=160, padding_idx=0, smoothing=0.1)
    # Multi-tile grid with a partial trailing block (forced small tile).
    _run_case(k3, N=40, V=96, padding_idx=0, smoothing=0.1, tile_rows=16)
    # bf16 input path (loss accumulated in f32, true_dist emitted in bf16).
    _run_case(k4, N=24, V=128, padding_idx=0, smoothing=0.2, dtype=jnp.bfloat16)

    print("KERNEL_OK")
</pallas_src>

<mosaic_0001>
module attributes {stable_mosaic.version = 11 : i64} {
  func.func @_label_smoothing_kernel(%arg0: i32, %arg1: memref<8x128xf32, #tpu.memory_space<vmem>>, %arg2: memref<8x1xi32, #tpu.memory_space<vmem>>, %arg3: memref<1x1xf32, #tpu.memory_space<smem>>) attributes {dimension_semantics = [#tpu.dimension_semantics<parallel>], iteration_bounds = array<i64: 1>, scalar_prefetch = 0 : i64, scratch_operands = 0 : i64, tpu.core_type = #tpu.core_type<tc>, window_params = [{transform_indices = @transform_0, window_bounds = array<i64: 8, 128>}, {transform_indices = @transform_1, window_bounds = array<i64: 8, 1>}, {transform_indices = @transform_2, window_bounds = array<i64: 1, 1>}]} {
    %c0 = arith.constant 0 : index
    %c0_0 = arith.constant 0 : index
    %0 = vector.load %arg1[%c0, %c0_0] : memref<8x128xf32, #tpu.memory_space<vmem>>, vector<8x128xf32>
    %c0_1 = arith.constant 0 : index
    %c0_2 = arith.constant 0 : index
    %1 = vector.load %arg2[%c0_1, %c0_2] : memref<8x1xi32, #tpu.memory_space<vmem>>, vector<8x1xi32>
    %2 = tpu.iota {dimensions = array<i32: 1>} : vector<1x128xi32>
    %c0_i32 = arith.constant 0 : i32
    %3 = vector.broadcast %c0_i32 : i32 to vector<1x128xi32>
    %4 = arith.cmpi eq, %2, %3 : vector<1x128xi32>
    %cst = arith.constant 0.000000e+00 : f32
    %cst_3 = arith.constant 7.93650805E-4 : f32
    %5 = vector.broadcast %cst : f32 to vector<1x128xf32>
    %6 = vector.broadcast %cst_3 : f32 to vector<1x128xf32>
    %7 = arith.select %4, %5, %6 : vector<1x128xi1>, vector<1x128xf32>
    %8 = tpu.iota {dimensions = array<i32: 0>} : vector<8x1xi32>
    %c8_i32 = arith.constant 8 : i32
    %9 = arith.muli %arg0, %c8_i32 : i32
    %10 = vector.broadcast %9 : i32 to vector<8x1xi32>
    %11 = arith.addi %8, %10 : vector<8x1xi32>
    %c8_i32_4 = arith.constant 8 : i32
    %12 = vector.broadcast %c8_i32_4 : i32 to vector<8x1xi32>
    %13 = arith.cmpi slt, %11, %12 : vector<8x1xi32>
    %c0_i32_5 = arith.constant 0 : i32
    %14 = vector.broadcast %c0_i32_5 : i32 to vector<8x1xi32>
    %15 = arith.cmpi ne, %1, %14 : vector<8x1xi32>
    %16 = arith.andi %13, %15 : vector<8x1xi1>
    %17 = vector.broadcast %2 : vector<1x128xi32> to vector<8x128xi32>
    %18 = vector.broadcast %1 : vector<8x1xi32> to vector<8x128xi32>
    %19 = arith.cmpi eq, %17, %18 : vector<8x128xi32>
    %cst_6 = arith.constant 0.899999976 : f32
    %20 = vector.broadcast %cst_6 : f32 to vector<8x128xf32>
    %21 = vector.shape_cast %7 : vector<1x128xf32> to vector<1x128xf32>
    %22 = vector.broadcast %21 : vector<1x128xf32> to vector<8x128xf32>
    %23 = arith.select %19, %20, %22 : vector<8x128xi1>, vector<8x128xf32>
    %cst_7 = arith.constant -0.105360515 : f32
    %cst_8 = arith.constant -7.1388669 : f32
    %24 = vector.broadcast %cst_7 : f32 to vector<8x128xf32>
    %25 = vector.broadcast %cst_8 : f32 to vector<8x128xf32>
    %26 = arith.select %19, %24, %25 : vector<8x128xi1>, vector<8x128xf32>
    %27 = arith.subf %26, %0 : vector<8x128xf32>
    %28 = arith.mulf %23, %27 : vector<8x128xf32>
    %cst_9 = arith.constant dense<0.000000e+00> : vector<8xf32>
    %29 = vector.multi_reduction <add>, %28, %cst_9 [1] : vector<8x128xf32> to vector<8xf32>
    %30 = vector.shape_cast %29 : vector<8xf32> to vector<8x1xf32>
    %cst_10 = arith.constant 0.000000e+00 : f32
    %31 = vector.broadcast %cst_10 : f32 to vector<8x1xf32>
    %32 = arith.select %16, %30, %31 : vector<8x1xi1>, vector<8x1xf32>
    %33 = vector.shape_cast %32 : vector<8x1xf32> to vector<1x8x1xf32>
    %cst_11 = arith.constant dense<0.000000e+00> : vector<1xf32>
    %34 = vector.multi_reduction <add>, %33, %cst_11 [1, 2] : vector<1x8x1xf32> to vector<1xf32>
    %35 = vector.shape_cast %34 : vector<1xf32> to vector<1x1x1xf32>
    %36 = vector.extract %35[0, 0, 0] : f32 from vector<1x1x1xf32>
    %c0_12 = arith.constant 0 : index
    %c0_13 = arith.constant 0 : index
    %37 = memref.load %arg3[%c0_12, %c0_13] : memref<1x1xf32, #tpu.memory_space<smem>>
    memref.store %36, %arg3[%c0_12, %c0_13] : memref<1x1xf32, #tpu.memory_space<smem>>
    return
  }
  func.func @transform_0(%arg0: i32) -> (i32, i32) {
    %c0_i32 = arith.constant 0 : i32
    %c0_i32_0 = arith.constant 0 : i32
    return %arg0, %c0_i32 : i32, i32
  }
  func.func @transform_1(%arg0: i32) -> (i32, i32) {
    %c0_i32 = arith.constant 0 : i32
    %c0_i32_0 = arith.constant 0 : i32
    return %arg0, %c0_i32 : i32, i32
  }
  func.func @transform_2(%arg0: i32) -> (i32, i32) {
    %c0_i32 = arith.constant 0 : i32
    %c0_i32_0 = arith.constant 0 : i32
    return %arg0, %c0_i32 : i32, i32
  }
}

</mosaic_0001>

<llo_original>
// kernel: tpu_custom_call.1
$region0: #{tpu_custom_call.1}
  #allocation0 [shape = 'u32[]', space=smem, size = 0x4, offset = 0x4, fixed_abs, tag = 'smem constant byte address 0x4 - core index']
  #allocation1 [shape = 'u32[144,128]{1,0:T(1,128)}', space=vmem, size = 0x12000, scoped, tag = 'internal scratch']
  %s0 = inlined_call_operand.vmem [shape: f32[8,128], index: 0, kind: input, shape index: {}]
  %s1 = inlined_call_operand.vmem [shape: s32[8,1], index: 1, kind: input, shape index: {}]
  %s2 = inlined_call_operand.hbm [shape: f32[1,1], index: 2, kind: output, shape index: {}]
  %s3 = sld [smem:[#allocation0]]
  $region18: #{tpu_custom_call.1} parent=0
    _
  %s5 = ssub.s32 1, %s3
  %s6 = scalar_select 0, %s5, %s3
  $region1: #{tpu_custom_call.1} parent=0
    #allocation2 [shape = 'u8[512]{0}', space=smem, size = 0x200, scoped, tag = 'output window, operand 0, single buffered']
    #allocation3 [shape = 's32[1]{0}', space=sflag, size = 0x4, scoped, tag = 'scoped memory for tpu_custom_call.1']
    %7 = vsyncpa [#allocation3], 0
    // Predicated region
    $region2: #{tpu_custom_call.1} parent=1 // pred_check
      _
    $region3: #{tpu_custom_call.1} parent=1 // pred_check_branch
      %9 = sbr.rel (0) target = $region5
    $region4: #{tpu_custom_call.1} parent=1 // pred_region
      _
    $region5: #{tpu_custom_call.1} parent=1 // pred_fallthru
      _
    // Predicated region
    $region6: #{tpu_custom_call.1} parent=1 // pred_check
      _
    $region7: #{tpu_custom_call.1} parent=1 // pred_check_branch
      %11 = sbr.rel (0) target = $region9
    $region8: #{tpu_custom_call.1} parent=1 // pred_region
      _
    $region9: #{tpu_custom_call.1} parent=1 // pred_fallthru
      _
    %v12 = vld [vmem:[%s0] sm:$0xff]
    %v13 = vld [vmem:[%s1] sm:$0xff]
    %v14 = vlaneseq
    %v15 = vand.u32 %v14, 127
    %vm16 = vcmp.eq.s32.totalorder %v15, 0
    %v17 = vsel %vm16, 0.0, 0.0007936508
    %v18 = vlaneseq
    %v19 = vshrl.u32 %v18, 7
    %s20 = smul.u32 0, 8
    %v21 = vstv %s20
    %v22 = vadd.s32 %v19, %v21
    %vm23 = vcmp.lt.s32.totalorder %v22, 8
    %vm24 = vcmp.ne.s32.totalorder %v13, 0
    %vm25 = vmand %vm23, %vm24
    %26 = vset.pattern.permute.xlu0 0
    %27 = vperm.xlu0 %26, %v13
    %v28 = vpop.permute.xlu0 %27
    %vm29 = vcmp.eq.s32.totalorder %v15, %v28
    %v30 = vsel %vm29, 0.9, %v17
    %v31 = vsel %vm29, -0.105360515, -7.138867
    %v32 = vsub.f32 %v31, %v12
    %v33 = vmul.f32 %v30, %v32
    %34 = vadd.xlane.f32.xlu0 %v33
    %v35 = vpop.xlane.xlu0 %34
    %v36 = vsel %vm25, %v35, 0.0
    %vm37 = vcmask 7168
    %v38 = vsel %vm37, %v36, 0.0
    %39 = vadd.xlane.f32.xlu0 %v38
    %v40 = vpop.xlane.xlu0 %39
    %v41 = vrot.slane %v40, 4
    %v42 = vadd.f32 %v40, %v41
    %v43 = vrot.slane %v42, 2
    %v44 = vadd.f32 %v42, %v43
    %v45 = vrot.slane %v44, 1
    %v46 = vadd.f32 %v44, %v45
    %s47 = vtos %v46
    %s48 = scalar_lea.smem [#allocation2], 0
    %49 = sst [smem:[%s48]] %s47
    // Predicated region
    $region10: #{tpu_custom_call.1} parent=1 // pred_check
      _
    $region11: #{tpu_custom_call.1} parent=1 // pred_check_branch
      %51 = sbr.rel (0) target = $region13
    $region12: #{tpu_custom_call.1} parent=1 // pred_region
      %s53 = ssub.s32 16, 16
      %54 = vsyncadd [#allocation3], %s53
      %57 = dma.smem_to_hbm [#allocation2], 16, %s2, [#allocation3]
    $region13: #{tpu_custom_call.1} parent=1 // pred_fallthru
      _
    // Predicated region
    $region14: #{tpu_custom_call.1} parent=1 // pred_check
      _
    $region15: #{tpu_custom_call.1} parent=1 // pred_check_branch
      %59 = sbr.rel (0) target = $region17
    $region16: #{tpu_custom_call.1} parent=1 // pred_region
      %60 = dma.done [#allocation3], 16
    $region17: #{tpu_custom_call.1} parent=1 // pred_fallthru
      _
    %61 = sfence
    %62 = vsyncpa [#allocation3], 1

</llo_original>
